<compile_context>
chip_gen: v7x
topology: tpu7x:2x2x1
jax: 0.10.0
libtpu: 0.0.40
codegen_flags: <defaults>
</compile_context>

<pallas_src>
import jax
import jax.numpy as jnp
from jax.experimental import pallas as pl
from jax.experimental.pallas import tpu as pltpu

MARGIN = 1.0
LANES = 128
SUBLANES = 8
NUM_CORE_SPLITS = 2          # leading "parallel" grid axis (dual-TC on v7x)
DEFAULT_BLOCK_ROWS = 4096    # 2 MiB f32 per input block per step


def _make_hinge_kernel(rows, block_rows, blocks_per_core, num_blocks):
    """rows / block_rows / blocks_per_core / num_blocks are static Python ints."""
    has_virtual_blocks = NUM_CORE_SPLITS * blocks_per_core > num_blocks
    any_mask = (rows % block_rows != 0) or has_virtual_blocks

    def _fold(hinge):
        # (block_rows, 128) -> (8, 128): tile-aligned reshape + vreg-wise adds
        # (pure VALU, no XLU, no extra VMEM traffic).
        return hinge.reshape(block_rows // SUBLANES, SUBLANES, LANES).sum(axis=0)

    def kernel(x_ref, t_ref, out_ref):
        c = pl.program_id(0)   # core-split index (parallel)
        i = pl.program_id(1)   # streaming block index (arbitrary / reduction)

        @pl.when(i == 0)
        def _():
            out_ref[...] = jnp.zeros_like(out_ref)

        # TODO(synk): keep mul/sub/max in bf16 for bf16 inputs on v6e/v7x and
        # upcast only at the accumulate; f32 upcast kept for v5e portability.
        x = x_ref[...].astype(jnp.float32)
        t = t_ref[...].astype(jnp.float32)
        hinge = jnp.maximum(jnp.float32(MARGIN) - x * t, jnp.float32(0.0))

        if any_mask:
            b = c * blocks_per_core + i          # virtual (unclamped) block id
            row0 = b * block_rows
            is_edge = row0 + block_rows > rows   # ragged or fully-virtual block

            @pl.when(jnp.logical_not(is_edge))
            def _():
                out_ref[...] += _fold(hinge)

            @pl.when(is_edge)
            def _():
                # Mask rows past the real data (covers both the ragged last
                # real block and duplicated fully-virtual blocks, whose DMA was
                # clamped to the last real block by the index_map).
                row_ids = row0 + jax.lax.broadcasted_iota(
                    jnp.int32, (block_rows, LANES), 0)
                masked = jnp.where(row_ids < rows, hinge, jnp.float32(0.0))
                out_ref[...] += _fold(masked)
        else:
            out_ref[...] += _fold(hinge)

    return kernel


def hinge_loss(x, target, *, block_rows=DEFAULT_BLOCK_ROWS):
    """Pallas equivalent of HingeLoss.forward(input, target)."""
    n = x.size
    x_flat = x.reshape(-1)
    t_flat = target.reshape(-1)

    rem = n % LANES
    n_aligned = n - rem

    total = jnp.float32(0.0)
    if rem:
        # <=127-element tail handled in plain JAX (cheaper than padding the
        # whole array, which cannot fuse into the pallas_call).
        xt = x_flat[n_aligned:].astype(jnp.float32)
        tt = t_flat[n_aligned:].astype(jnp.float32)
        total = jnp.sum(jnp.maximum(jnp.float32(MARGIN) - xt * tt, 0.0))

    if n_aligned:
        rows = n_aligned // LANES
        x2d = x_flat[:n_aligned].reshape(rows, LANES)
        t2d = t_flat[:n_aligned].reshape(rows, LANES)

        itemsize_x = jnp.dtype(x.dtype).itemsize
        itemsize_t = jnp.dtype(target.dtype).itemsize
        # Sublane alignment for the narrowest input dtype: f32:8, bf16:16, i8:32.
        sub_align = SUBLANES * max(1, 4 // max(1, min(itemsize_x, itemsize_t)))
        rows_up = pl.cdiv(rows, sub_align) * sub_align
        block_rows = max(sub_align,
                         min((block_rows // sub_align) * sub_align, rows_up))

        num_blocks = pl.cdiv(rows, block_rows)
        blocks_per_core = pl.cdiv(num_blocks, NUM_CORE_SPLITS)

        if NUM_CORE_SPLITS * blocks_per_core > num_blocks:
            # Clamp virtual blocks to the last real block (their contribution
            # is fully masked in-kernel) so every DMA stays in bounds.
            def in_index(c, i):
                return (jnp.minimum(c * blocks_per_core + i, num_blocks - 1), 0)
        else:
            def in_index(c, i):
                return (c * blocks_per_core + i, 0)

        # Double-buffered input footprint; raise the scoped VMEM limit only
        # when a large requested block would exceed the smallest default.
        dbl_buf = 2 * block_rows * LANES * (itemsize_x + itemsize_t)
        vmem_limit = None
        if dbl_buf + (2 << 20) > (16 << 20):
            vmem_limit = min(dbl_buf + (4 << 20), 64 << 20)

        cost = pl.CostEstimate(
            flops=4 * n_aligned,
            transcendentals=0,
            bytes_accessed=n_aligned * (itemsize_x + itemsize_t)
            + NUM_CORE_SPLITS * SUBLANES * LANES * 4,
        )

        partials = pl.pallas_call(
            _make_hinge_kernel(rows, block_rows, blocks_per_core, num_blocks),
            out_shape=jax.ShapeDtypeStruct(
                (NUM_CORE_SPLITS * SUBLANES, LANES), jnp.float32),
            grid_spec=pltpu.PrefetchScalarGridSpec(
                num_scalar_prefetch=0,
                grid=(NUM_CORE_SPLITS, blocks_per_core),
                in_specs=[
                    pl.BlockSpec((block_rows, LANES), in_index),
                    pl.BlockSpec((block_rows, LANES), in_index),
                ],
                out_specs=pl.BlockSpec((SUBLANES, LANES), lambda c, i: (c, 0)),
            ),
            compiler_params=pltpu.CompilerParams(
                dimension_semantics=("parallel", "arbitrary"),
                vmem_limit_bytes=vmem_limit,
            ),
            cost_estimate=cost,
        )(x2d, t2d)

        total = total + jnp.sum(partials)

    return total / jnp.float32(n)


if __name__ == "__main__":
    key = jax.random.PRNGKey(0)
    k1, k2, k3, k4 = jax.random.split(key, 4)

    # Per-sample scores (batch=8, classes=130) — deliberately not a multiple
    # of 128 to exercise the JAX lane-tail path + single-block kernel path.
    x = jax.random.normal(k1, (8, 130), dtype=jnp.float32)
    target = jnp.where(
        jax.random.bernoulli(k2, 0.5, (8, 130)), 1.0, -1.0
    ).astype(jnp.float32)

    loss = jax.block_until_ready(hinge_loss(x, target))
    ref = jnp.mean(jnp.maximum(MARGIN - x * target, 0.0))
    assert jnp.allclose(loss, ref, rtol=1e-5, atol=1e-6), (loss, ref)

    # Second case forcing the tiled + dual-split + ragged/virtual-block path:
    # rows=20, block_rows=8 -> grid (2, 2) with a masked ragged block and a
    # clamped fully-masked virtual block.
    x2 = jax.random.normal(k3, (20, 130), dtype=jnp.float32)
    target2 = jnp.where(
        jax.random.bernoulli(k4, 0.5, (20, 130)), 1.0, -1.0
    ).astype(jnp.float32)
    loss2 = jax.block_until_ready(hinge_loss(x2, target2, block_rows=8))
    ref2 = jnp.mean(jnp.maximum(MARGIN - x2 * target2, 0.0))
    assert jnp.allclose(loss2, ref2, rtol=1e-5, atol=1e-6), (loss2, ref2)

    print("KERNEL_OK")
</pallas_src>

<mosaic_0001>
module attributes {stable_mosaic.version = 11 : i64} {
  func.func @kernel(%arg0: i32, %arg1: i32, %arg2: memref<8x128xf32, #tpu.memory_space<vmem>>, %arg3: memref<8x128xf32, #tpu.memory_space<vmem>>, %arg4: memref<8x128xf32, #tpu.memory_space<vmem>>) attributes {dimension_semantics = [#tpu.dimension_semantics<parallel>, #tpu.dimension_semantics<arbitrary>], iteration_bounds = array<i64: 2, 1>, scalar_prefetch = 0 : i64, scratch_operands = 0 : i64, tpu.core_type = #tpu.core_type<tc>, window_params = [{transform_indices = @transform_0, window_bounds = array<i64: 8, 128>}, {transform_indices = @transform_1, window_bounds = array<i64: 8, 128>}, {transform_indices = @transform_2, window_bounds = array<i64: 8, 128>}]} {
    %c0_i32 = arith.constant 0 : i32
    %0 = arith.cmpi eq, %arg1, %c0_i32 : i32
    %1 = arith.extui %0 : i1 to i32
    %c0_i32_0 = arith.constant 0 : i32
    %2 = arith.cmpi ne, %1, %c0_i32_0 : i32
    scf.if %2 {
      %cst_9 = arith.constant 0.000000e+00 : f32
      %20 = vector.broadcast %cst_9 : f32 to vector<8x128xf32>
      %c0_10 = arith.constant 0 : index
      %c0_11 = arith.constant 0 : index
      %21 = vector.load %arg4[%c0_10, %c0_11] : memref<8x128xf32, #tpu.memory_space<vmem>>, vector<8x128xf32>
      tpu.vector_store %arg4[%c0_10, %c0_11], %20 {strides = array<i32>} : memref<8x128xf32, #tpu.memory_space<vmem>>, vector<8x128xf32>,
    } else {
    }
    %c0 = arith.constant 0 : index
    %c0_1 = arith.constant 0 : index
    %3 = vector.load %arg2[%c0, %c0_1] : memref<8x128xf32, #tpu.memory_space<vmem>>, vector<8x128xf32>
    %c0_2 = arith.constant 0 : index
    %c0_3 = arith.constant 0 : index
    %4 = vector.load %arg3[%c0_2, %c0_3] : memref<8x128xf32, #tpu.memory_space<vmem>>, vector<8x128xf32>
    %5 = arith.mulf %3, %4 : vector<8x128xf32>
    %cst = arith.constant 1.000000e+00 : f32
    %6 = vector.broadcast %cst : f32 to vector<8x128xf32>
    %7 = arith.subf %6, %5 : vector<8x128xf32>
    %cst_4 = arith.constant 0.000000e+00 : f32
    %8 = vector.broadcast %cst_4 : f32 to vector<8x128xf32>
    %9 = arith.maximumf %7, %8 : vector<8x128xf32>
    %c1_i32 = arith.constant 1 : i32
    %10 = arith.muli %arg0, %c1_i32 : i32
    %11 = arith.addi %10, %arg1 : i32
    %c8_i32 = arith.constant 8 : i32
    %12 = arith.muli %11, %c8_i32 : i32
    %c8_i32_5 = arith.constant 8 : i32
    %13 = arith.addi %12, %c8_i32_5 : i32
    %c8_i32_6 = arith.constant 8 : i32
    %14 = arith.cmpi sgt, %13, %c8_i32_6 : i32
    %true = arith.constant true
    %15 = arith.xori %14, %true : i1
    %16 = arith.extui %15 : i1 to i32
    %c0_i32_7 = arith.constant 0 : i32
    %17 = arith.cmpi ne, %16, %c0_i32_7 : i32
    scf.if %17 {
      %c0_9 = arith.constant 0 : index
      %c0_10 = arith.constant 0 : index
      %20 = vector.load %arg4[%c0_9, %c0_10] : memref<8x128xf32, #tpu.memory_space<vmem>>, vector<8x128xf32>
      %21 = vector.shape_cast %9 : vector<8x128xf32> to vector<1x8x128xf32>
      %cst_11 = arith.constant dense<0.000000e+00> : vector<8x128xf32>
      %22 = vector.multi_reduction <add>, %21, %cst_11 [0] : vector<1x8x128xf32> to vector<8x128xf32>
      %23 = arith.addf %20, %22 : vector<8x128xf32>
      %c0_12 = arith.constant 0 : index
      %c0_13 = arith.constant 0 : index
      %24 = vector.load %arg4[%c0_12, %c0_13] : memref<8x128xf32, #tpu.memory_space<vmem>>, vector<8x128xf32>
      tpu.vector_store %arg4[%c0_12, %c0_13], %23 {strides = array<i32>} : memref<8x128xf32, #tpu.memory_space<vmem>>, vector<8x128xf32>,
    } else {
    }
    %18 = arith.extui %14 : i1 to i32
    %c0_i32_8 = arith.constant 0 : i32
    %19 = arith.cmpi ne, %18, %c0_i32_8 : i32
    scf.if %19 {
      %20 = tpu.iota {dimensions = array<i32: 0>} : vector<8x128xi32>
      %21 = vector.broadcast %12 : i32 to vector<8x128xi32>
      %22 = arith.addi %21, %20 : vector<8x128xi32>
      %c8_i32_9 = arith.constant 8 : i32
      %23 = vector.broadcast %c8_i32_9 : i32 to vector<8x128xi32>
      %24 = arith.cmpi slt, %22, %23 : vector<8x128xi32>
      %cst_10 = arith.constant 0.000000e+00 : f32
      %25 = vector.broadcast %cst_10 : f32 to vector<8x128xf32>
      %26 = arith.select %24, %9, %25 : vector<8x128xi1>, vector<8x128xf32>
      %c0_11 = arith.constant 0 : index
      %c0_12 = arith.constant 0 : index
      %27 = vector.load %arg4[%c0_11, %c0_12] : memref<8x128xf32, #tpu.memory_space<vmem>>, vector<8x128xf32>
      %28 = vector.shape_cast %26 : vector<8x128xf32> to vector<1x8x128xf32>
      %cst_13 = arith.constant dense<0.000000e+00> : vector<8x128xf32>
      %29 = vector.multi_reduction <add>, %28, %cst_13 [0] : vector<1x8x128xf32> to vector<8x128xf32>
      %30 = arith.addf %27, %29 : vector<8x128xf32>
      %c0_14 = arith.constant 0 : index
      %c0_15 = arith.constant 0 : index
      %31 = vector.load %arg4[%c0_14, %c0_15] : memref<8x128xf32, #tpu.memory_space<vmem>>, vector<8x128xf32>
      tpu.vector_store %arg4[%c0_14, %c0_15], %30 {strides = array<i32>} : memref<8x128xf32, #tpu.memory_space<vmem>>, vector<8x128xf32>,
    } else {
    }
    return
  }
  func.func @transform_0(%arg0: i32, %arg1: i32) -> (i32, i32) {
    %c1_i32 = arith.constant 1 : i32
    %0 = arith.muli %arg0, %c1_i32 : i32
    %1 = arith.addi %0, %arg1 : i32
    %c0_i32 = arith.constant 0 : i32
    %2 = arith.minsi %1, %c0_i32 : i32
    %c0_i32_0 = arith.constant 0 : i32
    %c0_i32_1 = arith.constant 0 : i32
    return %2, %c0_i32_0 : i32, i32
  }
  func.func @transform_1(%arg0: i32, %arg1: i32) -> (i32, i32) {
    %c1_i32 = arith.constant 1 : i32
    %0 = arith.muli %arg0, %c1_i32 : i32
    %1 = arith.addi %0, %arg1 : i32
    %c0_i32 = arith.constant 0 : i32
    %2 = arith.minsi %1, %c0_i32 : i32
    %c0_i32_0 = arith.constant 0 : i32
    %c0_i32_1 = arith.constant 0 : i32
    return %2, %c0_i32_0 : i32, i32
  }
  func.func @transform_2(%arg0: i32, %arg1: i32) -> (i32, i32) {
    %c0_i32 = arith.constant 0 : i32
    %c0_i32_0 = arith.constant 0 : i32
    return %arg0, %c0_i32 : i32, i32
  }
}

</mosaic_0001>

<llo_original>
// kernel: tpu_custom_call.1
$region0: #{tpu_custom_call.1}
  #allocation0 [shape = 'u32[]', space=smem, size = 0x4, offset = 0x4, fixed_abs, tag = 'smem constant byte address 0x4 - core index']
  #allocation1 [shape = 'u32[144,128]{1,0:T(1,128)}', space=vmem, size = 0x12000, scoped, tag = 'internal scratch']
  %s0 = inlined_call_operand.hbm [shape: f32[8,128], index: 0, kind: input, shape index: {}]
  %s1 = inlined_call_operand.hbm [shape: f32[8,128], index: 1, kind: input, shape index: {}]
  %s2 = inlined_call_operand.hbm [shape: f32[16,128], index: 2, kind: output, shape index: {}]
  %s3 = sld [smem:[#allocation0]]
  $region61: #{tpu_custom_call.1} parent=0
    _
  %s5 = ssub.s32 1, %s3
  %s6 = scalar_select 0, %s5, %s3
  $region1: #{tpu_custom_call.1} parent=0
    #allocation2 [shape = 'u8[8192]{0}', space=vmem, size = 0x2000, scoped, tag = 'input window, operand 0']
    #allocation3 [shape = 's32[2]{0}', space=sflag, size = 0x8, scoped, tag = 'scoped memory for tpu_custom_call.1']
    #allocation4 [shape = 's32[2]{0}', space=sflag, size = 0x8, scoped, tag = 'scoped memory for tpu_custom_call.1']
    #allocation5 [shape = 'u8[8192]{0}', space=vmem, size = 0x2000, scoped, tag = 'input window, operand 1']
    #allocation6 [shape = 's32[2]{0}', space=sflag, size = 0x8, scoped, tag = 'scoped memory for tpu_custom_call.1']
    #allocation7 [shape = 'u8[8192]{0}', space=vmem, size = 0x2000, scoped, tag = 'output window, operand 0']
    %7 = vsyncpa [#allocation3], 0
    %s8 = scalar_lea.sflag [#allocation3], 1
    %9 = vsyncpa %s8, 0
    %10 = vsyncpa [#allocation6], 0
    %s11 = scalar_lea.sflag [#allocation6], 1
    %12 = vsyncpa %s11, 0
    %13 = vsyncpa [#allocation4], 0
    %s14 = scalar_lea.sflag [#allocation4], 1
    %15 = vsyncpa %s14, 0
    loop: start=0, step=1, limit=4
    $region2: #{tpu_custom_call.1} parent=1 // loop_pre_header
      _
    $region3: #{tpu_custom_call.1} parent=1 // loop_header
      %s17 = sphi 0, %s21
      %p18 = scmp.ge.s32.totalorder %s17, 4
      %s24 = sphi 0, %s36
      %s25 = sphi 0, %s32
      %s26 = sphi 0, %s24
      %s27 = sphi 0, %s25
      %s28 = sphi 0, %s26
      %s29 = sphi 0, %s27
      %s45 = sphi 0, %s47
      %s48 = sphi 0, %s45
      %s49 = sphi 0, %s48
      %s65 = sphi 0, %s49
      %s77 = sphi 0, %s79
      %s80 = sphi 0, %s77
      %s81 = sphi 0, %s80
      %s97 = sphi 0, %s81
      %s103 = sphi 0, %s105
      %s106 = sphi 0, %s103
      %s107 = sphi 0, %s106
      %s123 = sphi 0, %s107
    $region4: #{tpu_custom_call.1} parent=1 // loop_header_branch
      %20 = sbr.rel (%p18) target = $region8
    $region5: #{tpu_custom_call.1} parent=1 // loop_body
      %s22 = ssub.s32 %s17, 1
      %s23 = ssub.s32 %s17, 2
      %s30 = sadd.s32 1, %s25
      %p31 = scmp.ge.s32.totalorder %s30, 1
      %s32 = scalar_select %p31, 0, %s30
      %s33 = sadd.s32 1, %s24
      %s34 = scalar_select %p31, %s33, %s24
      %p35 = scmp.ge.s32.totalorder %s34, 2
      %s36 = scalar_select %p35, 0, %s34
      %s37 = sadd.s32 %s24, %s25
      %p38 = scmp.lt.s32.totalorder %s37, 0
      %s39 = scalar_select %p38, %s37, 0
      %s40 = sadd.s32 %s36, %s32
      %p41 = scmp.lt.s32.totalorder %s40, 0
      %s42 = scalar_select %p41, %s40, 0
      %s43 = ssub.s32 %s39, %s42
      %p44 = scmp.eq.s32.totalorder %s43, 0
      %s46 = sadd.s32 %s45, 1
      %s47 = scalar_select %p44, %s45, %s46
      %p50 = pneg %p44
      %p51 = scmp.eq.s32.totalorder %s17, 1
      %p52 = por %p50, %p51
      %p53 = scmp.ne.s32.totalorder %s45, %s48
      %p54 = scmp.eq.s32.totalorder %s17, 0
      %p55 = por %p53, %p54
      %p56 = scmp.ne.s32.totalorder %s45, %s48
      %p57 = scmp.eq.s32.totalorder %s22, 1
      %p58 = por %p56, %p57
      %p59 = scmp.ne.s32.totalorder %s48, %s49
      %p60 = scmp.eq.s32.totalorder %s22, 0
      %p61 = por %p59, %p60
      %p62 = scmp.ne.s32.totalorder %s48, %s49
      %p63 = scmp.eq.s32.totalorder %s23, 1
      %p64 = por %p62, %p63
      %p66 = scmp.ne.s32.totalorder %s49, %s65
      %p67 = scmp.eq.s32.totalorder %s23, 0
      %p68 = por %p66, %p67
      %s69 = sadd.s32 %s24, %s25
      %p70 = scmp.lt.s32.totalorder %s69, 0
      %s71 = scalar_select %p70, %s69, 0
      %s72 = sadd.s32 %s36, %s32
      %p73 = scmp.lt.s32.totalorder %s72, 0
      %s74 = scalar_select %p73, %s72, 0
      %s75 = ssub.s32 %s71, %s74
      %p76 = scmp.eq.s32.totalorder %s75, 0
      %s78 = sadd.s32 %s77, 1
      %s79 = scalar_select %p76, %s77, %s78
      %p82 = pneg %p76
      %p83 = scmp.eq.s32.totalorder %s17, 1
      %p84 = por %p82, %p83
      %p85 = scmp.ne.s32.totalorder %s77, %s80
      %p86 = scmp.eq.s32.totalorder %s17, 0
      %p87 = por %p85, %p86
      %p88 = scmp.ne.s32.totalorder %s77, %s80
      %p89 = scmp.eq.s32.totalorder %s22, 1
      %p90 = por %p88, %p89
      %p91 = scmp.ne.s32.totalorder %s80, %s81
      %p92 = scmp.eq.s32.totalorder %s22, 0
      %p93 = por %p91, %p92
      %p94 = scmp.ne.s32.totalorder %s80, %s81
      %p95 = scmp.eq.s32.totalorder %s23, 1
      %p96 = por %p94, %p95
      %p98 = scmp.ne.s32.totalorder %s81, %s97
      %p99 = scmp.eq.s32.totalorder %s23, 0
      %p100 = por %p98, %p99
      %s101 = ssub.s32 %s24, %s36
      %p102 = scmp.eq.s32.totalorder %s101, 0
      %s104 = sadd.s32 %s103, 1
      %s105 = scalar_select %p102, %s103, %s104
      %p108 = pneg %p102
      %p109 = scmp.eq.s32.totalorder %s17, 1
      %p110 = por %p108, %p109
      %p111 = scmp.ne.s32.totalorder %s103, %s106
      %p112 = scmp.eq.s32.totalorder %s17, 0
      %p113 = por %p111, %p112
      %p114 = scmp.ne.s32.totalorder %s103, %s106
      %p115 = scmp.eq.s32.totalorder %s22, 1
      %p116 = por %p114, %p115
      %p117 = scmp.ne.s32.totalorder %s106, %s107
      %p118 = scmp.eq.s32.totalorder %s22, 0
      %p119 = por %p117, %p118
      %p120 = scmp.ne.s32.totalorder %s106, %s107
      %p121 = scmp.eq.s32.totalorder %s23, 1
      %p122 = por %p120, %p121
      %p124 = scmp.ne.s32.totalorder %s107, %s123
      %p125 = scmp.eq.s32.totalorder %s23, 0
      %p126 = por %p124, %p125
      %p127 = scmp.le.s32.totalorder 1, %s17
      %p128 = scmp.lt.s32.totalorder %s17, 3
      %p129 = pnand %p127, %p128
      %p130 = pneg %p129
      // Predicated region
      $region9: #{tpu_custom_call.1} parent=5 // pred_check
        _
      $region10: #{tpu_custom_call.1} parent=5 // pred_check_branch
        %132 = sbr.rel (%p129) target = $region12
      $region11: #{tpu_custom_call.1} parent=5 // pred_region
        %s133 = ssub.s32 %s17, 1
      $region12: #{tpu_custom_call.1} parent=5 // pred_fallthru
        _
      %p134 = scmp.lt.s32.totalorder %s17, 2
      // Predicated region
      $region13: #{tpu_custom_call.1} parent=5 // pred_check
        %p135 = pneg %p134
      $region14: #{tpu_custom_call.1} parent=5 // pred_check_branch
        %137 = sbr.rel (%p135) target = $region16
      $region15: #{tpu_custom_call.1} parent=5 // pred_region
        // Predicated region
        $region17: #{tpu_custom_call.1} parent=15 // pred_check
          %p138 = pneg %p55
        $region18: #{tpu_custom_call.1} parent=15 // pred_check_branch
          %140 = sbr.rel (%p138) target = $region20
        $region19: #{tpu_custom_call.1} parent=15 // pred_region
          %s141 = sand.u32 %s45, 1
          %s142 = scalar_lea.sflag [#allocation3], %s141
          %s143 = sand.u32 %s45, 1
          %s144 = smul.addr %s143, 8
          %s145 = scalar_lea.vmem [#allocation2], %s144
          %s146 = sadd.s32 %s24, %s25
          %p147 = scmp.lt.s32.totalorder %s146, 0
          %s148 = scalar_select %p147, %s146, 0
          %s150 = ssub.s32 128, 128
          %151 = vsyncadd %s142, %s150
          %s152 = smul.addr %s148, 128
          %s153 = scalar_lea.hbm %s0, %s152
          %s155 = sshll.u32 %s145, 4
          %s156 = int_to_ptr.vmem [resolvable:$true] %s155
          %158 = dma.hbm_to_vmem [thread:$0]  %s153, 128, %s156, %s142
        $region20: #{tpu_custom_call.1} parent=15 // pred_fallthru
          _
        // Predicated region
        $region21: #{tpu_custom_call.1} parent=15 // pred_check
          %p159 = pneg %p87
        $region22: #{tpu_custom_call.1} parent=15 // pred_check_branch
          %161 = sbr.rel (%p159) target = $region24
        $region23: #{tpu_custom_call.1} parent=15 // pred_region
          %s162 = sand.u32 %s77, 1
          %s163 = scalar_lea.sflag [#allocation6], %s162
          %s164 = sand.u32 %s77, 1
          %s165 = smul.addr %s164, 8
          %s166 = scalar_lea.vmem [#allocation5], %s165
          %s167 = sadd.s32 %s24, %s25
          %p168 = scmp.lt.s32.totalorder %s167, 0
          %s169 = scalar_select %p168, %s167, 0
          %s171 = ssub.s32 128, 128
          %172 = vsyncadd %s163, %s171
          %s173 = smul.addr %s169, 128
          %s174 = scalar_lea.hbm %s1, %s173
          %s176 = sshll.u32 %s166, 4
          %s177 = int_to_ptr.vmem [resolvable:$true] %s176
          %179 = dma.hbm_to_vmem [thread:$0]  %s174, 128, %s177, %s163
        $region24: #{tpu_custom_call.1} parent=15 // pred_fallthru
          _
      $region16: #{tpu_custom_call.1} parent=5 // pred_fallthru
        _
      %p180 = scmp.le.s32.totalorder 1, %s17
      %p181 = scmp.lt.s32.totalorder %s17, 3
      %p182 = pnand %p180, %p181
      %p183 = pneg %p182
      // Predicated region
      $region25: #{tpu_custom_call.1} parent=5 // pred_check
        _
      $region26: #{tpu_custom_call.1} parent=5 // pred_check_branch
        %185 = sbr.rel (%p182) target = $region28
      $region27: #{tpu_custom_call.1} parent=5 // pred_region
        %s186 = ssub.s32 %s17, 1
        %s187 = sand.u32 %s48, 1
        %s188 = scalar_lea.sflag [#allocation3], %s187
        %s189 = sand.u32 %s48, 1
        %s190 = smul.addr %s189, 8
        %s191 = scalar_lea.vmem [#allocation2], %s190
        // Predicated region
        $region29: #{tpu_custom_call.1} parent=27 // pred_check
          %p192 = pneg %p61
        $region30: #{tpu_custom_call.1} parent=27 // pred_check_branch
          %194 = sbr.rel (%p192) target = $region32
        $region31: #{tpu_custom_call.1} parent=27 // pred_region
          %195 = dma.done %s188, 128
        $region32: #{tpu_custom_call.1} parent=27 // pred_fallthru
          _
        %s196 = sand.u32 %s80, 1
        %s197 = scalar_lea.sflag [#allocation6], %s196
        %s198 = sand.u32 %s80, 1
        %s199 = smul.addr %s198, 8
        %s200 = scalar_lea.vmem [#allocation5], %s199
        // Predicated region
        $region33: #{tpu_custom_call.1} parent=27 // pred_check
          %p201 = pneg %p93
        $region34: #{tpu_custom_call.1} parent=27 // pred_check_branch
          %203 = sbr.rel (%p201) target = $region36
        $region35: #{tpu_custom_call.1} parent=27 // pred_region
          %204 = dma.done %s197, 128
        $region36: #{tpu_custom_call.1} parent=27 // pred_fallthru
          _
        %s205 = sand.u32 %s48, 1
        %s206 = scalar_lea.sflag [#allocation3], %s205
        %s207 = sand.u32 %s48, 1
        %s208 = smul.addr %s207, 8
        %s209 = scalar_lea.vmem [#allocation2], %s208
        %p210 = pneg %p61
        %p211 = pneg %p58
        %s212 = sand.u32 %s80, 1
        %s213 = scalar_lea.sflag [#allocation6], %s212
        %s214 = sand.u32 %s80, 1
        %s215 = smul.addr %s214, 8
        %s216 = scalar_lea.vmem [#allocation5], %s215
        %p217 = pneg %p93
        %p218 = pneg %p90
        %p219 = pneg %p119
        %p220 = pneg %p116
        %s221 = sand.u32 %s106, 1
        %s222 = scalar_lea.sflag [#allocation4], %s221
        %s223 = sand.u32 %s106, 1
        %s224 = smul.addr %s223, 8
        %s225 = scalar_lea.vmem [#allocation7], %s224
        %s226 = sadd.s32 %s26, %s27
        %p227 = scmp.lt.s32.totalorder %s226, 0
        %s228 = scalar_select %p227, %s226, 0
        %s229 = sadd.s32 %s26, %s27
        %p230 = scmp.lt.s32.totalorder %s229, 0
        %s231 = scalar_select %p230, %s229, 0
        %p232 = scmp.eq.s32.totalorder %s27, 0
        // Predicated region
        $region37: #{tpu_custom_call.1} parent=27 // pred_check
          %p233 = pneg %p232
        $region38: #{tpu_custom_call.1} parent=27 // pred_check_branch
          %235 = sbr.rel (%p233) target = $region40
        $region39: #{tpu_custom_call.1} parent=27 // pred_region
          %236 = vst [vmem:[%s225] sm:$0xff] 0.0
        $region40: #{tpu_custom_call.1} parent=27 // pred_fallthru
          _
        %v237 = vld [vmem:[%s191] sm:$0xff]
        %v238 = vld [vmem:[%s200] sm:$0xff]
        %v239 = vmul.f32 %v237, %v238
        %v240 = vsub.f32 1.0, %v239
        %v241 = vmax.f32 %v240, 0.0
        %s242 = sadd.s32 %s26, %s27
        %s243 = smul.u32 %s242, 8
        %s244 = sadd.s32 %s243, 8
        %p245 = scmp.gt.s32.totalorder %s244, 8
        %p246 = scmp.le.s32.totalorder %s244, 8
        // Predicated region
        $region41: #{tpu_custom_call.1} parent=27 // pred_check
          %p247 = pneg %p246
        $region42: #{tpu_custom_call.1} parent=27 // pred_check_branch
          %249 = sbr.rel (%p247) target = $region44
        $region43: #{tpu_custom_call.1} parent=27 // pred_region
          %v250 = vld [vmem:[%s225] sm:$0xff]
          %v251 = vadd.f32 %v241, 0.0
          %v252 = vadd.f32 %v250, %v251
          %253 = vst [vmem:[%s225] sm:$0xff] %v252
        $region44: #{tpu_custom_call.1} parent=27 // pred_fallthru
          _
        // Predicated region
        $region45: #{tpu_custom_call.1} parent=27 // pred_check
          %p254 = pneg %p245
        $region46: #{tpu_custom_call.1} parent=27 // pred_check_branch
          %256 = sbr.rel (%p254) target = $region48
        $region47: #{tpu_custom_call.1} parent=27 // pred_region
          %v257 = vlaneseq
          %v258 = vshrl.u32 %v257, 7
          %v259 = vstv %s243
          %v260 = vadd.s32 %v259, %v258
          %vm261 = vcmp.lt.s32.totalorder %v260, 8
          %v262 = vsel %vm261, %v241, 0.0
          %v263 = vld [vmem:[%s225] sm:$0xff]
          %v264 = vadd.f32 %v262, 0.0
          %v265 = vadd.f32 %v263, %v264
          %266 = vst [vmem:[%s225] sm:$0xff] %v265
        $region48: #{tpu_custom_call.1} parent=27 // pred_fallthru
          _
        %s267 = sand.u32 %s106, 1
        %s268 = scalar_lea.sflag [#allocation4], %s267
        %s269 = sand.u32 %s106, 1
        %s270 = smul.addr %s269, 8
        %s271 = scalar_lea.vmem [#allocation7], %s270
        // Predicated region
        $region49: #{tpu_custom_call.1} parent=27 // pred_check
          %p272 = pneg %p116
        $region50: #{tpu_custom_call.1} parent=27 // pred_check_branch
          %274 = sbr.rel (%p272) target = $region52
        $region51: #{tpu_custom_call.1} parent=27 // pred_region
          %s276 = ssub.s32 128, 128
          %277 = vsyncadd %s268, %s276
          %s278 = smul.addr %s26, 128
          %s279 = scalar_lea.hbm %s2, %s278
          %s281 = sshll.u32 %s271, 4
          %s282 = int_to_ptr.vmem [resolvable:$true] %s281
          %284 = dma.vmem_to_hbm [thread:$0]  %s282, 128, %s279, %s268
        $region52: #{tpu_custom_call.1} parent=27 // pred_fallthru
          _
      $region28: #{tpu_custom_call.1} parent=5 // pred_fallthru
        _
      %p285 = scmp.le.s32.totalorder 2, %s17
      // Predicated region
      $region53: #{tpu_custom_call.1} parent=5 // pred_check
        %p286 = pneg %p285
      $region54: #{tpu_custom_call.1} parent=5 // pred_check_branch
        %288 = sbr.rel (%p286) target = $region56
      $region55: #{tpu_custom_call.1} parent=5 // pred_region
        %s289 = ssub.s32 %s17, 2
        // Predicated region
        $region57: #{tpu_custom_call.1} parent=55 // pred_check
          %p290 = pneg %p122
        $region58: #{tpu_custom_call.1} parent=55 // pred_check_branch
          %292 = sbr.rel (%p290) target = $region60
        $region59: #{tpu_custom_call.1} parent=55 // pred_region
          %s293 = sand.u32 %s107, 1
          %s294 = scalar_lea.sflag [#allocation4], %s293
          %s295 = sand.u32 %s107, 1
          %s296 = smul.addr %s295, 8
          %s297 = scalar_lea.vmem [#allocation7], %s296
          %298 = dma.done %s294, 128
        $region60: #{tpu_custom_call.1} parent=55 // pred_fallthru
          _
      $region56: #{tpu_custom_call.1} parent=5 // pred_fallthru
        _
    $region6: #{tpu_custom_call.1} parent=1 // loop_footer
      %s21 = sadd.s32 1, %s17
    $region7: #{tpu_custom_call.1} parent=1 // loop_footer_branch
      %16 = sbr.rel target = $region3
    $region8: #{tpu_custom_call.1} parent=1 // loop_exit
      _
    %299 = vsyncpa [#allocation3], 1
    %s300 = scalar_lea.sflag [#allocation3], 1
    %301 = vsyncpa %s300, 1
    %302 = vsyncpa [#allocation6], 1
    %s303 = scalar_lea.sflag [#allocation6], 1
    %304 = vsyncpa %s303, 1
    %305 = vsyncpa [#allocation4], 1
    %s306 = scalar_lea.sflag [#allocation4], 1
    %307 = vsyncpa %s306, 1

</llo_original>
